<compile_context>
chip_gen: v7x
topology: tpu7x:2x2x1
jax: 0.10.0
libtpu: 0.0.40
codegen_flags: <defaults>
</compile_context>

<pallas_src>
import jax
import jax.numpy as jnp
from jax.experimental import pallas as pl
from jax.experimental.pallas import tpu as pltpu


# ------------------------------ helpers ------------------------------------ #

def _round_up(x, m):
    return (x + m - 1) // m * m


def _pick_tile(n_pad, cap):
    """Largest multiple of 128 that divides n_pad and is <= cap (>= 128)."""
    cap = max(128, min(cap, n_pad))
    t = (cap // 128) * 128
    while n_pad % t:
        t -= 128
    return t


def _vmem_estimate(n_pad, d_pad, tm, tk, x_resident):
    a_bytes = 2 * tm * tk * 2                           # bf16 A, double buffered
    x_bytes = (2 * n_pad * d_pad * 2) if x_resident else (2 * tk * d_pad * 2)
    sum_in = 2 * tm * d_pad * 4                         # f32 running-sum input
    outs = 2 * (tm * d_pad * 2 + tm * d_pad * 4)        # bf16 x_out + f32 sum_out
    return a_bytes + x_bytes + sum_in + outs


def _choose_config(n_pad, d_pad, budget=40 * 1024 * 1024):
    # Large row tile (cuts redundant X refetch, amortizes ~0.35us/step), but
    # keep >= 2 row tiles so the "parallel" axis shards across v7x's 2 TCs.
    tm = _pick_tile(n_pad, min(1024, n_pad // 2))
    tk = _pick_tile(n_pad, 2048)
    x_resident = 2 * n_pad * d_pad * 2 <= budget // 3
    while _vmem_estimate(n_pad, d_pad, tm, tk, x_resident) > budget and tk > 128:
        tk = _pick_tile(n_pad, tk // 2)
    while _vmem_estimate(n_pad, d_pad, tm, tk, x_resident) > budget and tm > 128:
        tm = _pick_tile(n_pad, tm // 2)
    return tm, tk, x_resident


# ----------------------------- Pallas kernels ------------------------------ #

def _make_step_kernel(tk, x_resident):
    """One intermediate LightGCN layer.

    Outputs:
      x_out   = (A @ x)            (bf16, input to the next layer)
      sum_out = sum_in + (A @ x)   (f32 running layer sum)
    sum_out doubles as the f32 accumulator (its block index is constant over k).
    """

    def kernel(a_ref, x_ref, sum_in_ref, x_out_ref, sum_out_ref):
        k = pl.program_id(1)

        @pl.when(k == 0)
        def _():
            sum_out_ref[...] = jnp.zeros_like(sum_out_ref)

        if x_resident:
            off = pl.multiple_of(k * tk, tk)
            x_blk = x_ref[pl.ds(off, tk), :]          # slice of the resident bf16 X
        else:
            x_blk = x_ref[...]                        # K-sliced bf16 X block

        sum_out_ref[...] += jnp.dot(a_ref[...], x_blk,
                                    preferred_element_type=jnp.float32)

        @pl.when(k == pl.num_programs(1) - 1)
        def _():
            x_out_ref[...] = sum_out_ref[...].astype(x_out_ref.dtype)
            sum_out_ref[...] = sum_out_ref[...] + sum_in_ref[...]

    return kernel


def _make_final_kernel(tk, x_resident, inv_count):
    """Last layer with fused mean: out = (sum_in + A @ x) * inv_count (f32).
    The f32 output block is the accumulator (no scratch needed)."""

    def kernel(a_ref, x_ref, sum_in_ref, o_ref):
        k = pl.program_id(1)

        @pl.when(k == 0)
        def _():
            o_ref[...] = jnp.zeros_like(o_ref)

        if x_resident:
            off = pl.multiple_of(k * tk, tk)
            x_blk = x_ref[pl.ds(off, tk), :]
        else:
            x_blk = x_ref[...]

        o_ref[...] += jnp.dot(a_ref[...], x_blk,
                              preferred_element_type=jnp.float32)

        @pl.when(k == pl.num_programs(1) - 1)
        def _():
            o_ref[...] = (o_ref[...] + sum_in_ref[...]) * inv_count

    return kernel


# ------------------------------ wrappers ------------------------------------ #

_COMPILER_PARAMS = pltpu.CompilerParams(
    dimension_semantics=("parallel", "arbitrary"),
    # Above the v5e default scoped limit (16 MiB); tile chooser budgets the
    # working set to ~40 MiB so this also fits v7x's 64 MiB/TC.
    vmem_limit_bytes=56 * 1024 * 1024,
)


def _make_specs(n_pad, d_pad, tm, tk, x_resident):
    a_spec = pl.BlockSpec((tm, tk), lambda i, k: (i, k))
    if x_resident:
        # Whole X resident in VMEM; fetched once (index map constant).
        # (pipeline_mode=pl.Buffered(1) would halve its VMEM footprint.)
        x_spec = pl.BlockSpec((n_pad, d_pad), lambda i, k: (0, 0))
    else:
        x_spec = pl.BlockSpec((tk, d_pad), lambda i, k: (k, 0))
    row_spec = pl.BlockSpec((tm, d_pad), lambda i, k: (i, 0))
    return a_spec, x_spec, row_spec


def lg_propagate_step(a_bf16, x_bf16, sum_in, *, tm, tk, x_resident):
    n_pad, d_pad = x_bf16.shape
    a_spec, x_spec, row_spec = _make_specs(n_pad, d_pad, tm, tk, x_resident)
    return pl.pallas_call(
        _make_step_kernel(tk, x_resident),
        out_shape=(jax.ShapeDtypeStruct((n_pad, d_pad), jnp.bfloat16),
                   jax.ShapeDtypeStruct((n_pad, d_pad), jnp.float32)),
        grid=(n_pad // tm, n_pad // tk),
        in_specs=[a_spec, x_spec, row_spec],
        out_specs=(row_spec, row_spec),
        compiler_params=_COMPILER_PARAMS,
    )(a_bf16, x_bf16, sum_in)


def lg_propagate_final(a_bf16, x_bf16, sum_in, *, inv_count, tm, tk, x_resident):
    n_pad, d_pad = x_bf16.shape
    a_spec, x_spec, row_spec = _make_specs(n_pad, d_pad, tm, tk, x_resident)
    return pl.pallas_call(
        _make_final_kernel(tk, x_resident, inv_count),
        out_shape=jax.ShapeDtypeStruct((n_pad, d_pad), jnp.float32),
        grid=(n_pad // tm, n_pad // tk),
        in_specs=[a_spec, x_spec, row_spec],
        out_specs=row_spec,
        compiler_params=_COMPILER_PARAMS,
    )(a_bf16, x_bf16, sum_in)


# ------------------------------- glue (JAX) -------------------------------- #

def build_norm_adj(edge_index, num_nodes, n_pad=None, dtype=jnp.float32):
    """Symmetric-normalized adjacency (gcn_norm, add_self_loops=False),
    scattered directly into a padded buffer in the target dtype (no extra
    full-size f32 copies). Assumes edge_index contains both edge directions."""
    if n_pad is None:
        n_pad = num_nodes
    src = edge_index[0]
    dst = edge_index[1]
    ones = jnp.ones(src.shape[0], dtype=jnp.float32)
    deg = jax.ops.segment_sum(ones, dst, num_segments=num_nodes)
    deg_inv_sqrt = jnp.where(deg > 0, jax.lax.rsqrt(deg), 0.0)
    norm = deg_inv_sqrt[src] * deg_inv_sqrt[dst]
    a = jnp.zeros((n_pad, n_pad), dtype)
    # out[dst] += norm * x[src]  ==>  A[dst, src] = norm
    a = a.at[dst, src].add(norm.astype(dtype))
    return a


def xavier_uniform(key, shape):
    fan_in, fan_out = shape[0], shape[1]
    bound = jnp.sqrt(6.0 / (fan_in + fan_out))
    return jax.random.uniform(
        key, shape, dtype=jnp.float32, minval=-bound, maxval=bound
    )


def lightgcn_forward(embedding_weight, edge_index, num_layers=2, *, x_resident=None):
    n, d = embedding_weight.shape
    if num_layers == 0:
        return embedding_weight

    # Pad nodes to a multiple of 256 and the embedding dim to a multiple of
    # 128 so every block is (8,128)/(16,128)-aligned and stores are lane-dense.
    n_pad = _round_up(n, 256)
    d_pad = _round_up(d, 128)
    tm, tk, auto_resident = _choose_config(n_pad, d_pad)
    if x_resident is None:
        x_resident = auto_resident

    a_bf16 = build_norm_adj(edge_index, n, n_pad, dtype=jnp.bfloat16)

    x0_f32 = jnp.zeros((n_pad, d_pad), jnp.float32).at[:n, :d].set(embedding_weight)
    x_bf16 = x0_f32.astype(jnp.bfloat16)     # matmul operand lives in bf16 in HBM
    layer_sum = x0_f32                        # single f32 running sum (x0)

    for _ in range(num_layers - 1):
        x_bf16, layer_sum = lg_propagate_step(
            a_bf16, x_bf16, layer_sum, tm=tm, tk=tk, x_resident=x_resident)

    out = lg_propagate_final(
        a_bf16, x_bf16, layer_sum, inv_count=1.0 / (num_layers + 1),
        tm=tm, tk=tk, x_resident=x_resident)
    return out[:n, :d]


def lightgcn_reference(embedding_weight, edge_index, num_layers=2):
    """Pure-JAX f32 reference of the PyTorch forward."""
    n = embedding_weight.shape[0]
    a = build_norm_adj(edge_index, n, n, dtype=jnp.float32)
    xs = [embedding_weight]
    x = embedding_weight
    for _ in range(num_layers):
        x = a @ x
        xs.append(x)
    return sum(xs) / len(xs)


# --------------------------------- driver ---------------------------------- #

if __name__ == "__main__":
    NUM_NODES = 256
    EMBED_DIM = 64
    NUM_LAYERS = 2
    NUM_EDGES = 1024

    key = jax.random.PRNGKey(0)
    k_emb, k_src, k_dst = jax.random.split(key, 3)

    # Deterministic parameters (nn.Embedding with xavier_uniform_).
    embedding_weight = xavier_uniform(k_emb, (NUM_NODES, EMBED_DIM))

    # Deterministic symmetrized edge_index [2, 2*NUM_EDGES].
    src = jax.random.randint(k_src, (NUM_EDGES,), 0, NUM_NODES)
    dst = jax.random.randint(k_dst, (NUM_EDGES,), 0, NUM_NODES)
    edge_index = jnp.stack(
        [jnp.concatenate([src, dst]), jnp.concatenate([dst, src])], axis=0
    ).astype(jnp.int32)

    ref = lightgcn_reference(embedding_weight, edge_index, NUM_LAYERS)

    # Primary path: auto config (VMEM-resident bf16 X at this size).
    out = lightgcn_forward(embedding_weight, edge_index, NUM_LAYERS)
    out = jax.block_until_ready(out)
    assert out.shape == (NUM_NODES, EMBED_DIM)
    assert jnp.isfinite(out).all()
    err_resident = float(jnp.max(jnp.abs(out - ref)))
    assert err_resident < 2e-2, f"resident-X max abs err {err_resident}"

    # Fallback path: K-sliced X blocks (used when X does not fit VMEM).
    out_tiled = lightgcn_forward(embedding_weight, edge_index, NUM_LAYERS,
                                 x_resident=False)
    out_tiled = jax.block_until_ready(out_tiled)
    err_tiled = float(jnp.max(jnp.abs(out_tiled - ref)))
    assert err_tiled < 2e-2, f"tiled-X max abs err {err_tiled}"

    print("KERNEL_OK")
</pallas_src>

<mosaic_0001>
module attributes {stable_mosaic.version = 11 : i64} {
  func.func @kernel(%arg0: i32, %arg1: i32, %arg2: memref<128x256xbf16, #tpu.memory_space<vmem>>, %arg3: memref<256x128xbf16, #tpu.memory_space<vmem>>, %arg4: memref<128x128xf32, #tpu.memory_space<vmem>>, %arg5: memref<128x128xbf16, #tpu.memory_space<vmem>>, %arg6: memref<128x128xf32, #tpu.memory_space<vmem>>) attributes {dimension_semantics = [#tpu.dimension_semantics<parallel>, #tpu.dimension_semantics<arbitrary>], iteration_bounds = array<i64: 2, 1>, scalar_prefetch = 0 : i64, scratch_operands = 0 : i64, tpu.core_type = #tpu.core_type<tc>, window_params = [{transform_indices = @transform_0, window_bounds = array<i64: 128, 256>}, {pipeline_mode = #tpu.pipeline_mode<synchronous>, transform_indices = @transform_1, window_bounds = array<i64: 256, 128>}, {transform_indices = @transform_2, window_bounds = array<i64: 128, 128>}, {transform_indices = @transform_3, window_bounds = array<i64: 128, 128>}, {transform_indices = @transform_4, window_bounds = array<i64: 128, 128>}]} {
    %c0_i32 = arith.constant 0 : i32
    %0 = arith.cmpi eq, %arg1, %c0_i32 : i32
    %1 = arith.extui %0 : i1 to i32
    %c0_i32_0 = arith.constant 0 : i32
    %2 = arith.cmpi ne, %1, %c0_i32_0 : i32
    scf.if %2 {
      %cst_9 = arith.constant 0.000000e+00 : f32
      %15 = vector.broadcast %cst_9 : f32 to vector<128x128xf32>
      %c0_10 = arith.constant 0 : index
      %c0_11 = arith.constant 0 : index
      %16 = vector.load %arg6[%c0_10, %c0_11] : memref<128x128xf32, #tpu.memory_space<vmem>>, vector<128x128xf32>
      tpu.vector_store %arg6[%c0_10, %c0_11], %15 {strides = array<i32>} : memref<128x128xf32, #tpu.memory_space<vmem>>, vector<128x128xf32>,
    } else {
    }
    %c256_i32 = arith.constant 256 : i32
    %3 = arith.muli %arg1, %c256_i32 : i32
    %4 = tpu.assume_multiple %3, 256 : i32
    %5 = arith.index_cast %4 : i32 to index
    %c0 = arith.constant 0 : index
    %6 = vector.load %arg3[%5, %c0] : memref<256x128xbf16, #tpu.memory_space<vmem>>, vector<256x128xbf16>
    %c0_1 = arith.constant 0 : index
    %c0_2 = arith.constant 0 : index
    %7 = vector.load %arg6[%c0_1, %c0_2] : memref<128x128xf32, #tpu.memory_space<vmem>>, vector<128x128xf32>
    %c0_3 = arith.constant 0 : index
    %c0_4 = arith.constant 0 : index
    %8 = vector.load %arg2[%c0_3, %c0_4] : memref<128x256xbf16, #tpu.memory_space<vmem>>, vector<128x256xbf16>
    %cst = arith.constant dense<0.000000e+00> : vector<128x128xf32>
    %9 = tpu.matmul %8, %6, %cst {dimension_numbers = #tpu.dot_dimension_numbers<[1], [0], [0], [1], [0, 0, 1, 1], [], []>} : vector<128x256xbf16>, vector<256x128xbf16>, vector<128x128xf32> -> vector<128x128xf32>
    %10 = arith.addf %7, %9 : vector<128x128xf32>
    %c0_5 = arith.constant 0 : index
    %c0_6 = arith.constant 0 : index
    %11 = vector.load %arg6[%c0_5, %c0_6] : memref<128x128xf32, #tpu.memory_space<vmem>>, vector<128x128xf32>
    tpu.vector_store %arg6[%c0_5, %c0_6], %10 {strides = array<i32>} : memref<128x128xf32, #tpu.memory_space<vmem>>, vector<128x128xf32>,
    %c0_i32_7 = arith.constant 0 : i32
    %12 = arith.cmpi eq, %arg1, %c0_i32_7 : i32
    %13 = arith.extui %12 : i1 to i32
    %c0_i32_8 = arith.constant 0 : i32
    %14 = arith.cmpi ne, %13, %c0_i32_8 : i32
    scf.if %14 {
      %c0_9 = arith.constant 0 : index
      %c0_10 = arith.constant 0 : index
      %15 = vector.load %arg6[%c0_9, %c0_10] : memref<128x128xf32, #tpu.memory_space<vmem>>, vector<128x128xf32>
      %16 = arith.truncf %15 : vector<128x128xf32> to vector<128x128xbf16>
      %c0_11 = arith.constant 0 : index
      %c0_12 = arith.constant 0 : index
      %17 = vector.load %arg5[%c0_11, %c0_12] : memref<128x128xbf16, #tpu.memory_space<vmem>>, vector<128x128xbf16>
      tpu.vector_store %arg5[%c0_11, %c0_12], %16 {strides = array<i32>} : memref<128x128xbf16, #tpu.memory_space<vmem>>, vector<128x128xbf16>,
      %c0_13 = arith.constant 0 : index
      %c0_14 = arith.constant 0 : index
      %18 = vector.load %arg6[%c0_13, %c0_14] : memref<128x128xf32, #tpu.memory_space<vmem>>, vector<128x128xf32>
      %c0_15 = arith.constant 0 : index
      %c0_16 = arith.constant 0 : index
      %19 = vector.load %arg4[%c0_15, %c0_16] : memref<128x128xf32, #tpu.memory_space<vmem>>, vector<128x128xf32>
      %20 = arith.addf %18, %19 : vector<128x128xf32>
      %c0_17 = arith.constant 0 : index
      %c0_18 = arith.constant 0 : index
      %21 = vector.load %arg6[%c0_17, %c0_18] : memref<128x128xf32, #tpu.memory_space<vmem>>, vector<128x128xf32>
      tpu.vector_store %arg6[%c0_17, %c0_18], %20 {strides = array<i32>} : memref<128x128xf32, #tpu.memory_space<vmem>>, vector<128x128xf32>,
    } else {
    }
    return
  }
  func.func @transform_0(%arg0: i32, %arg1: i32) -> (i32, i32) {
    %c0_i32 = arith.constant 0 : i32
    return %arg0, %arg1 : i32, i32
  }
  func.func @transform_1(%arg0: i32, %arg1: i32) -> (i32, i32) {
    %c0_i32 = arith.constant 0 : i32
    %c0_i32_0 = arith.constant 0 : i32
    %c0_i32_1 = arith.constant 0 : i32
    return %c0_i32, %c0_i32_0 : i32, i32
  }
  func.func @transform_2(%arg0: i32, %arg1: i32) -> (i32, i32) {
    %c0_i32 = arith.constant 0 : i32
    %c0_i32_0 = arith.constant 0 : i32
    return %arg0, %c0_i32 : i32, i32
  }
  func.func @transform_3(%arg0: i32, %arg1: i32) -> (i32, i32) {
    %c0_i32 = arith.constant 0 : i32
    %c0_i32_0 = arith.constant 0 : i32
    return %arg0, %c0_i32 : i32, i32
  }
  func.func @transform_4(%arg0: i32, %arg1: i32) -> (i32, i32) {
    %c0_i32 = arith.constant 0 : i32
    %c0_i32_0 = arith.constant 0 : i32
    return %arg0, %c0_i32 : i32, i32
  }
}

</mosaic_0001>

<llo_original>
// kernel: tpu_custom_call.1
$region0: #{tpu_custom_call.1}
  #allocation0 [shape = 'u32[]', space=smem, size = 0x4, offset = 0x4, fixed_abs, tag = 'smem constant byte address 0x4 - core index']
  #allocation1 [shape = 'u32[144,128]{1,0:T(1,128)}', space=vmem, size = 0x12000, scoped, tag = 'internal scratch']
  %s0 = inlined_call_operand.hbm [shape: bf16[256,256], index: 0, kind: input, shape index: {}]
  %s1 = inlined_call_operand.hbm [shape: bf16[256,128], index: 1, kind: input, shape index: {}]
  %s2 = inlined_call_operand.hbm [shape: f32[256,128], index: 2, kind: input, shape index: {}]
  %s3 = inlined_call_operand.hbm [shape: bf16[256,128], index: 3, kind: output, shape index: {0}]
  %s4 = inlined_call_operand.hbm [shape: f32[256,128], index: 4, kind: output, shape index: {1}]
  %5 = xla_tuple %s3, %s4
  %s6 = sld [smem:[#allocation0]]
  $region73: #{tpu_custom_call.1} parent=0
    _
  %s8 = ssub.s32 1, %s6
  %s9 = scalar_select 0, %s8, %s6
  $region1: #{tpu_custom_call.1} parent=0
    #allocation2 [shape = 'u8[131072]{0}', space=vmem, size = 0x20000, scoped, tag = 'input window, operand 0']
    #allocation3 [shape = 's32[2]{0}', space=sflag, size = 0x8, scoped, tag = 'scoped memory for tpu_custom_call.1']
    #allocation4 [shape = 's32[2]{0}', space=sflag, size = 0x8, scoped, tag = 'scoped memory for tpu_custom_call.1']
    #allocation5 [shape = 'u8[65536]{0}', space=vmem, size = 0x10000, scoped, tag = 'input window, operand 1, single buffered']
    #allocation6 [shape = 's32[1]{0}', space=sflag, size = 0x4, scoped, tag = 'scoped memory for tpu_custom_call.1']
    #allocation7 [shape = 'u8[131072]{0}', space=vmem, size = 0x20000, scoped, tag = 'input window, operand 2']
    #allocation8 [shape = 'u8[65536]{0}', space=vmem, size = 0x10000, scoped, tag = 'output window, operand 0']
    #allocation9 [shape = 'u8[131072]{0}', space=vmem, size = 0x20000, scoped, tag = 'output window, operand 1']
    #allocation10 [shape = 's32[2]{0}', space=sflag, size = 0x8, scoped, tag = 'scoped memory for tpu_custom_call.1']
    %10 = vsyncpa [#allocation3], 0
    %s11 = scalar_lea.sflag [#allocation3], 1
    %12 = vsyncpa %s11, 0
    %13 = vsyncpa [#allocation6], 0
    %14 = vsyncpa [#allocation4], 0
    %s15 = scalar_lea.sflag [#allocation4], 1
    %16 = vsyncpa %s15, 0
    %17 = vsyncpa [#allocation10], 0
    %s18 = scalar_lea.sflag [#allocation10], 1
    %19 = vsyncpa %s18, 0
    loop: start=0, step=1, limit=4
    $region2: #{tpu_custom_call.1} parent=1 // loop_pre_header
      _
    $region3: #{tpu_custom_call.1} parent=1 // loop_header
      %s21 = sphi 0, %s25
      %p22 = scmp.ge.s32.totalorder %s21, 4
      %s28 = sphi 0, %s40
      %s29 = sphi 0, %s36
      %s30 = sphi 0, %s28
      %s31 = sphi 0, %s29
      %s32 = sphi 0, %s30
      %s33 = sphi 0, %s31
      %s45 = sphi 0, %s47
      %s48 = sphi 0, %s45
      %s49 = sphi 0, %s48
      %s65 = sphi 0, %s49
      %s69 = sphi 0, %s69
      %s71 = sphi 0, %s69
      %s72 = sphi 0, %s71
      %s86 = sphi 0, %s72
      %s92 = sphi 0, %s94
      %s95 = sphi 0, %s92
      %s96 = sphi 0, %s95
      %s112 = sphi 0, %s96
      %s118 = sphi 0, %s120
      %s121 = sphi 0, %s118
      %s122 = sphi 0, %s121
      %s138 = sphi 0, %s122
      %s144 = sphi 0, %s146
      %s147 = sphi 0, %s144
      %s148 = sphi 0, %s147
      %s164 = sphi 0, %s148
    $region4: #{tpu_custom_call.1} parent=1 // loop_header_branch
      %24 = sbr.rel (%p22) target = $region8
    $region5: #{tpu_custom_call.1} parent=1 // loop_body
      %s26 = ssub.s32 %s21, 1
      %s27 = ssub.s32 %s21, 2
      %s34 = sadd.s32 1, %s29
      %p35 = scmp.ge.s32.totalorder %s34, 1
      %s36 = scalar_select %p35, 0, %s34
      %s37 = sadd.s32 1, %s28
      %s38 = scalar_select %p35, %s37, %s28
      %p39 = scmp.ge.s32.totalorder %s38, 2
      %s40 = scalar_select %p39, 0, %s38
      %s41 = ssub.s32 %s28, %s40
      %s42 = ssub.s32 %s29, %s36
      %s43 = sor.u32 %s41, %s42
      %p44 = scmp.eq.s32.totalorder %s43, 0
      %s46 = sadd.s32 %s45, 1
      %s47 = scalar_select %p44, %s45, %s46
      %p50 = pneg %p44
      %p51 = scmp.eq.s32.totalorder %s21, 1
      %p52 = por %p50, %p51
      %p53 = scmp.ne.s32.totalorder %s45, %s48
      %p54 = scmp.eq.s32.totalorder %s21, 0
      %p55 = por %p53, %p54
      %p56 = scmp.ne.s32.totalorder %s45, %s48
      %p57 = scmp.eq.s32.totalorder %s26, 1
      %p58 = por %p56, %p57
      %p59 = scmp.ne.s32.totalorder %s48, %s49
      %p60 = scmp.eq.s32.totalorder %s26, 0
      %p61 = por %p59, %p60
      %p62 = scmp.ne.s32.totalorder %s48, %s49
      %p63 = scmp.eq.s32.totalorder %s27, 1
      %p64 = por %p62, %p63
      %p66 = scmp.ne.s32.totalorder %s49, %s65
      %p67 = scmp.eq.s32.totalorder %s27, 0
      %p68 = por %p66, %p67
      %s70 = sadd.s32 %s69, 1
      %p73 = scmp.eq.s32.totalorder %s21, 1
      %p74 = scmp.ne.s32.totalorder %s69, %s71
      %p75 = scmp.eq.s32.totalorder %s21, 0
      %p76 = por %p74, %p75
      %p77 = scmp.ne.s32.totalorder %s69, %s71
      %p78 = scmp.eq.s32.totalorder %s26, 1
      %p79 = por %p77, %p78
      %p80 = scmp.ne.s32.totalorder %s71, %s72
      %p81 = scmp.eq.s32.totalorder %s26, 0
      %p82 = por %p80, %p81
      %p83 = scmp.ne.s32.totalorder %s71, %s72
      %p84 = scmp.eq.s32.totalorder %s27, 1
      %p85 = por %p83, %p84
      %p87 = scmp.ne.s32.totalorder %s72, %s86
      %p88 = scmp.eq.s32.totalorder %s27, 0
      %p89 = por %p87, %p88
      %s90 = ssub.s32 %s28, %s40
      %p91 = scmp.eq.s32.totalorder %s90, 0
      %s93 = sadd.s32 %s92, 1
      %s94 = scalar_select %p91, %s92, %s93
      %p97 = pneg %p91
      %p98 = scmp.eq.s32.totalorder %s21, 1
      %p99 = por %p97, %p98
      %p100 = scmp.ne.s32.totalorder %s92, %s95
      %p101 = scmp.eq.s32.totalorder %s21, 0
      %p102 = por %p100, %p101
      %p103 = scmp.ne.s32.totalorder %s92, %s95
      %p104 = scmp.eq.s32.totalorder %s26, 1
      %p105 = por %p103, %p104
      %p106 = scmp.ne.s32.totalorder %s95, %s96
      %p107 = scmp.eq.s32.totalorder %s26, 0
      %p108 = por %p106, %p107
      %p109 = scmp.ne.s32.totalorder %s95, %s96
      %p110 = scmp.eq.s32.totalorder %s27, 1
      %p111 = por %p109, %p110
      %p113 = scmp.ne.s32.totalorder %s96, %s112
      %p114 = scmp.eq.s32.totalorder %s27, 0
      %p115 = por %p113, %p114
      %s116 = ssub.s32 %s28, %s40
      %p117 = scmp.eq.s32.totalorder %s116, 0
      %s119 = sadd.s32 %s118, 1
      %s120 = scalar_select %p117, %s118, %s119
      %p123 = pneg %p117
      %p124 = scmp.eq.s32.totalorder %s21, 1
      %p125 = por %p123, %p124
      %p126 = scmp.ne.s32.totalorder %s118, %s121
      %p127 = scmp.eq.s32.totalorder %s21, 0
      %p128 = por %p126, %p127
      %p129 = scmp.ne.s32.totalorder %s118, %s121
      %p130 = scmp.eq.s32.totalorder %s26, 1
      %p131 = por %p129, %p130
      %p132 = scmp.ne.s32.totalorder %s121, %s122
      %p133 = scmp.eq.s32.totalorder %s26, 0
      %p134 = por %p132, %p133
      %p135 = scmp.ne.s32.totalorder %s121, %s122
      %p136 = scmp.eq.s32.totalorder %s27, 1
      %p137 = por %p135, %p136
      %p139 = scmp.ne.s32.totalorder %s122, %s138
      %p140 = scmp.eq.s32.totalorder %s27, 0
      %p141 = por %p139, %p140
      %s142 = ssub.s32 %s28, %s40
      %p143 = scmp.eq.s32.totalorder %s142, 0
      %s145 = sadd.s32 %s144, 1
      %s146 = scalar_select %p143, %s144, %s145
      %p149 = pneg %p143
      %p150 = scmp.eq.s32.totalorder %s21, 1
      %p151 = por %p149, %p150
      %p152 = scmp.ne.s32.totalorder %s144, %s147
      %p153 = scmp.eq.s32.totalorder %s21, 0
      %p154 = por %p152, %p153
      %p155 = scmp.ne.s32.totalorder %s144, %s147
      %p156 = scmp.eq.s32.totalorder %s26, 1
      %p157 = por %p155, %p156
      %p158 = scmp.ne.s32.totalorder %s147, %s148
      %p159 = scmp.eq.s32.totalorder %s26, 0
      %p160 = por %p158, %p159
      %p161 = scmp.ne.s32.totalorder %s147, %s148
      %p162 = scmp.eq.s32.totalorder %s27, 1
      %p163 = por %p161, %p162
      %p165 = scmp.ne.s32.totalorder %s148, %s164
      %p166 = scmp.eq.s32.totalorder %s27, 0
      %p167 = por %p165, %p166
      %p168 = scmp.le.s32.totalorder 1, %s21
      %p169 = scmp.lt.s32.totalorder %s21, 3
      %p170 = pnand %p168, %p169
      %p171 = pneg %p170
      // Predicated region
      $region9: #{tpu_custom_call.1} parent=5 // pred_check
        _
      $region10: #{tpu_custom_call.1} parent=5 // pred_check_branch
        %173 = sbr.rel (%p170) target = $region12
      $region11: #{tpu_custom_call.1} parent=5 // pred_region
        %s174 = ssub.s32 %s21, 1
        // Predicated region
        $region13: #{tpu_custom_call.1} parent=11 // pred_check
          %p175 = pneg %p82
        $region14: #{tpu_custom_call.1} parent=11 // pred_check_branch
          %177 = sbr.rel (%p175) target = $region16
        $region15: #{tpu_custom_call.1} parent=11 // pred_region
          %s179 = ssub.s32 2048, 2048
          %180 = vsyncadd [#allocation6], %s179
          %s181 = sshll.u32 [#allocation5], 4
          %s182 = int_to_ptr.vmem [resolvable:$true] %s181
          %187 = dma.hbm_to_vmem [thread:$0]  %s1, 2048, %s182, [#allocation6], 64, 64, 4
        $region16: #{tpu_custom_call.1} parent=11 // pred_fallthru
          _
      $region12: #{tpu_custom_call.1} parent=5 // pred_fallthru
        _
      %p188 = scmp.lt.s32.totalorder %s21, 2
      // Predicated region
      $region17: #{tpu_custom_call.1} parent=5 // pred_check
        %p189 = pneg %p188
      $region18: #{tpu_custom_call.1} parent=5 // pred_check_branch
        %191 = sbr.rel (%p189) target = $region20
      $region19: #{tpu_custom_call.1} parent=5 // pred_region
        // Predicated region
        $region21: #{tpu_custom_call.1} parent=19 // pred_check
          %p192 = pneg %p55
        $region22: #{tpu_custom_call.1} parent=19 // pred_check_branch
          %194 = sbr.rel (%p192) target = $region24
        $region23: #{tpu_custom_call.1} parent=19 // pred_region
          %s195 = sand.u32 %s21, 1
          %s196 = scalar_lea.sflag [#allocation3], %s195
          %s197 = sand.u32 %s45, 1
          %s198 = smul.addr %s197, 128
          %s199 = scalar_lea.vmem [#allocation2], %s198
          %s200 = smul.u32 16, %s28
          %s201 = smul.u32 2, %s29
          %s203 = ssub.s32 2048, 2048
          %204 = vsyncadd %s196, %s203
          %s205 = smul.addr %s200, 2
          %s206 = sadd.s32 %s201, %s205
          %s207 = smul.addr %s206, 64
          %s208 = scalar_lea.hbm %s0, %s207
          %s209 = sshll.u32 %s199, 4
          %s210 = int_to_ptr.vmem [resolvable:$true] %s209
          %215 = dma.hbm_to_vmem [thread:$0]  %s208, 2048, %s210, %s196, 128, 128, 8
        $region24: #{tpu_custom_call.1} parent=19 // pred_fallthru
          _
        // Predicated region
        $region25: #{tpu_custom_call.1} parent=19 // pred_check
          %p216 = pneg %p102
        $region26: #{tpu_custom_call.1} parent=19 // pred_check_branch
          %218 = sbr.rel (%p216) target = $region28
        $region27: #{tpu_custom_call.1} parent=19 // pred_region
          %s219 = sand.u32 %s21, 1
          %s220 = scalar_lea.sflag [#allocation3], %s219
          %s221 = sand.u32 %s92, 1
          %s222 = smul.addr %s221, 128
          %s223 = scalar_lea.vmem [#allocation7], %s222
          %s224 = smul.u32 16, %s28
          %s226 = ssub.s32 2048, 2048
          %227 = vsyncadd %s220, %s226
          %s228 = smul.addr %s224, 128
          %s229 = scalar_lea.hbm %s2, %s228
          %s230 = sshll.u32 %s223, 4
          %s231 = int_to_ptr.vmem [resolvable:$true] %s230
          %236 = dma.hbm_to_vmem [thread:$0]  %s229, 2048, %s231, %s220, 128, 128, 8
        $region28: #{tpu_custom_call.1} parent=19 // pred_fallthru
          _
      $region20: #{tpu_custom_call.1} parent=5 // pred_fallthru
        _
      %p237 = scmp.le.s32.totalorder 1, %s21
      %p238 = scmp.lt.s32.totalorder %s21, 3
      %p239 = pnand %p237, %p238
      %p240 = pneg %p239
      // Predicated region
      $region29: #{tpu_custom_call.1} parent=5 // pred_check
        _
      $region30: #{tpu_custom_call.1} parent=5 // pred_check_branch
        %242 = sbr.rel (%p239) target = $region32
      $region31: #{tpu_custom_call.1} parent=5 // pred_region
        %s243 = ssub.s32 %s21, 1
        %s244 = sand.u32 %s26, 1
        %s245 = scalar_lea.sflag [#allocation3], %s244
        %s246 = sand.u32 %s48, 1
        %s247 = smul.addr %s246, 128
        %s248 = scalar_lea.vmem [#allocation2], %s247
        // Predicated region
        $region33: #{tpu_custom_call.1} parent=31 // pred_check
          %p249 = pneg %p61
        $region34: #{tpu_custom_call.1} parent=31 // pred_check_branch
          %251 = sbr.rel (%p249) target = $region36
        $region35: #{tpu_custom_call.1} parent=31 // pred_region
          %252 = dma.done %s245, 2048
        $region36: #{tpu_custom_call.1} parent=31 // pred_fallthru
          _
        // Predicated region
        $region37: #{tpu_custom_call.1} parent=31 // pred_check
          %p253 = pneg %p82
        $region38: #{tpu_custom_call.1} parent=31 // pred_check_branch
          %255 = sbr.rel (%p253) target = $region40
        $region39: #{tpu_custom_call.1} parent=31 // pred_region
          %256 = dma.done [#allocation6], 2048
        $region40: #{tpu_custom_call.1} parent=31 // pred_fallthru
          _
        %s257 = sand.u32 %s26, 1
        %s258 = scalar_lea.sflag [#allocation3], %s257
        %s259 = sand.u32 %s95, 1
        %s260 = smul.addr %s259, 128
        %s261 = scalar_lea.vmem [#allocation7], %s260
        // Predicated region
        $region41: #{tpu_custom_call.1} parent=31 // pred_check
          %p262 = pneg %p108
        $region42: #{tpu_custom_call.1} parent=31 // pred_check_branch
          %264 = sbr.rel (%p262) target = $region44
        $region43: #{tpu_custom_call.1} parent=31 // pred_region
          %265 = dma.done %s258, 2048
        $region44: #{tpu_custom_call.1} parent=31 // pred_fallthru
          _
        %s266 = sand.u32 %s26, 1
        %s267 = scalar_lea.sflag [#allocation3], %s266
        %s268 = sand.u32 %s48, 1
        %s269 = smul.addr %s268, 128
        %s270 = scalar_lea.vmem [#allocation2], %s269
        %p271 = pneg %p61
        %p272 = pneg %p58
        %p273 = pneg %p82
        %p274 = pneg %p79
        %s275 = sand.u32 %s26, 1
        %s276 = scalar_lea.sflag [#allocation3], %s275
        %s277 = sand.u32 %s95, 1
        %s278 = smul.addr %s277, 128
        %s279 = scalar_lea.vmem [#allocation7], %s278
        %p280 = pneg %p108
        %p281 = pneg %p105
        %p282 = pneg %p134
        %p283 = pneg %p131
        %s284 = sand.u32 %s121, 1
        %s285 = scalar_lea.sflag [#allocation4], %s284
        %s286 = sand.u32 %s121, 1
        %s287 = smul.addr %s286, 64
        %s288 = scalar_lea.vmem [#allocation8], %s287
        %p289 = pneg %p160
        %p290 = pneg %p157
        %s291 = sand.u32 %s147, 1
        %s292 = scalar_lea.sflag [#allocation10], %s291
        %s293 = sand.u32 %s147, 1
        %s294 = smul.addr %s293, 128
        %s295 = scalar_lea.vmem [#allocation9], %s294
        %s296 = smul.u32 16, %s30
        %s297 = smul.u32 2, %s31
        %s298 = smul.u32 16, %s30
        %s299 = smul.u32 16, %s30
        %s300 = smul.u32 16, %s30
        %p302 = scmp.eq.s32.totalorder %s31, 0
        // Predicated region
        $region45: #{tpu_custom_call.1} parent=31 // pred_check
          %p303 = pneg %p302
        $region46: #{tpu_custom_call.1} parent=31 // pred_check_branch
          %305 = sbr.rel (%p303) target = $region48
        $region47: #{tpu_custom_call.1} parent=31 // pred_region
          %306 = vst [vmem:[%s295] sm:$0xff] 0.0
          %307 = vst [vmem:[%s295 + $0x8] sm:$0xff] 0.0
          %308 = vst [vmem:[%s295 + $0x10] sm:$0xff] 0.0
          %309 = vst [vmem:[%s295 + $0x18] sm:$0xff] 0.0
          %310 = vst [vmem:[%s295 + $0x20] sm:$0xff] 0.0
          %311 = vst [vmem:[%s295 + $0x28] sm:$0xff] 0.0
          %312 = vst [vmem:[%s295 + $0x30] sm:$0xff] 0.0
          %313 = vst [vmem:[%s295 + $0x38] sm:$0xff] 0.0
          %314 = vst [vmem:[%s295 + $0x40] sm:$0xff] 0.0
          %315 = vst [vmem:[%s295 + $0x48] sm:$0xff] 0.0
          %316 = vst [vmem:[%s295 + $0x50] sm:$0xff] 0.0
          %317 = vst [vmem:[%s295 + $0x58] sm:$0xff] 0.0
          %318 = vst [vmem:[%s295 + $0x60] sm:$0xff] 0.0
          %319 = vst [vmem:[%s295 + $0x68] sm:$0xff] 0.0
          %320 = vst [vmem:[%s295 + $0x70] sm:$0xff] 0.0
          %321 = vst [vmem:[%s295 + $0x78] sm:$0xff] 0.0
        $region48: #{tpu_custom_call.1} parent=31 // pred_fallthru
          _
        %s322 = smul.u32 %s31, 256
        %s323 = sshra.s32 %s322, 3
        %s324 = sand.u32 %s322, 7
        %s325 = smul.addr %s323, 4
        %s326 = scalar_lea.vmem [#allocation5], %s325
        %v327 = vld [vmem:[%s326] sm:$0xf]
        %v328 = vld [vmem:[%s326 + $0x4] sm:$0xf]
        %v329 = vld [vmem:[%s326 + $0x8] sm:$0xf]
        %v330 = vld [vmem:[%s326 + $0xc] sm:$0xf]
        %v331 = vld [vmem:[%s326 + $0x10] sm:$0xf]
        %v332 = vld [vmem:[%s326 + $0x14] sm:$0xf]
        %v333 = vld [vmem:[%s326 + $0x18] sm:$0xf]
        %v334 = vld [vmem:[%s326 + $0x1c] sm:$0xf]
        %v335 = vld [vmem:[%s326 + $0x20] sm:$0xf]
        %v336 = vld [vmem:[%s326 + $0x24] sm:$0xf]
        %v337 = vld [vmem:[%s326 + $0x28] sm:$0xf]
        %v338 = vld [vmem:[%s326 + $0x2c] sm:$0xf]
        %v339 = vld [vmem:[%s326 + $0x30] sm:$0xf]
        %v340 = vld [vmem:[%s326 + $0x34] sm:$0xf]
        %v341 = vld [vmem:[%s326 + $0x38] sm:$0xf]
        %v342 = vld [vmem:[%s326 + $0x3c] sm:$0xf]
        %v343 = vld [vmem:[%s326 + $0x40] sm:$0xf]
        %v344 = vld [vmem:[%s326 + $0x44] sm:$0xf]
        %v345 = vld [vmem:[%s326 + $0x48] sm:$0xf]
        %v346 = vld [vmem:[%s326 + $0x4c] sm:$0xf]
        %v347 = vld [vmem:[%s326 + $0x50] sm:$0xf]
        %v348 = vld [vmem:[%s326 + $0x54] sm:$0xf]
        %v349 = vld [vmem:[%s326 + $0x58] sm:$0xf]
        %v350 = vld [vmem:[%s326 + $0x5c] sm:$0xf]
        %v351 = vld [vmem:[%s326 + $0x60] sm:$0xf]
        %v352 = vld [vmem:[%s326 + $0x64] sm:$0xf]
        %v353 = vld [vmem:[%s326 + $0x68] sm:$0xf]
        %v354 = vld [vmem:[%s326 + $0x6c] sm:$0xf]
        %v355 = vld [vmem:[%s326 + $0x70] sm:$0xf]
        %v356 = vld [vmem:[%s326 + $0x74] sm:$0xf]
        %v357 = vld [vmem:[%s326 + $0x78] sm:$0xf]
        %v358 = vld [vmem:[%s326 + $0x7c] sm:$0xf]
        %v359 = vld [vmem:[%s295] sm:$0xff]
        %v360 = vld [vmem:[%s295 + $0x8] sm:$0xff]
        %v361 = vld [vmem:[%s295 + $0x10] sm:$0xff]
        %v362 = vld [vmem:[%s295 + $0x18] sm:$0xff]
        %v363 = vld [vmem:[%s295 + $0x20] sm:$0xff]
        %v364 = vld [vmem:[%s295 + $0x28] sm:$0xff]
        %v365 = vld [vmem:[%s295 + $0x30] sm:$0xff]
        %v366 = vld [vmem:[%s295 + $0x38] sm:$0xff]
        %v367 = vld [vmem:[%s295 + $0x40] sm:$0xff]
        %v368 = vld [vmem:[%s295 + $0x48] sm:$0xff]
        %v369 = vld [vmem:[%s295 + $0x50] sm:$0xff]
        %v370 = vld [vmem:[%s295 + $0x58] sm:$0xff]
        %v371 = vld [vmem:[%s295 + $0x60] sm:$0xff]
        %v372 = vld [vmem:[%s295 + $0x68] sm:$0xff]
        %v373 = vld [vmem:[%s295 + $0x70] sm:$0xff]
        %v374 = vld [vmem:[%s295 + $0x78] sm:$0xff]
        %v375 = vld [vmem:[%s248] sm:$0xff]
        %v376 = vld [vmem:[%s248 + $0x8] sm:$0xff]
        %v377 = vld [vmem:[%s248 + $0x10] sm:$0xff]
        %v378 = vld [vmem:[%s248 + $0x18] sm:$0xff]
        %v379 = vld [vmem:[%s248 + $0x20] sm:$0xff]
        %v380 = vld [vmem:[%s248 + $0x28] sm:$0xff]
        %v381 = vld [vmem:[%s248 + $0x30] sm:$0xff]
        %v382 = vld [vmem:[%s248 + $0x38] sm:$0xff]
        %v383 = vld [vmem:[%s248 + $0x40] sm:$0xff]
        %v384 = vld [vmem:[%s248 + $0x48] sm:$0xff]
        %v385 = vld [vmem:[%s248 + $0x50] sm:$0xff]
        %v386 = vld [vmem:[%s248 + $0x58] sm:$0xff]
        %v387 = vld [vmem:[%s248 + $0x60] sm:$0xff]
        %v388 = vld [vmem:[%s248 + $0x68] sm:$0xff]
        %v389 = vld [vmem:[%s248 + $0x70] sm:$0xff]
        %v390 = vld [vmem:[%s248 + $0x78] sm:$0xff]
        %v407 = vunpack.c.l.b16 %v375
        %v408 = vunpack.c.h.b16 %v375
        %v409 = vunpack.c.l.b16 %v376
        %v410 = vunpack.c.h.b16 %v376
        %v411 = vunpack.c.l.b16 %v377
        %v412 = vunpack.c.h.b16 %v377
        %v413 = vunpack.c.l.b16 %v378
        %v414 = vunpack.c.h.b16 %v378
        %v415 = vunpack.c.l.b16 %v379
        %v416 = vunpack.c.h.b16 %v379
        %v417 = vunpack.c.l.b16 %v380
        %v418 = vunpack.c.h.b16 %v380
        %v419 = vunpack.c.l.b16 %v381
        %v420 = vunpack.c.h.b16 %v381
        %v421 = vunpack.c.l.b16 %v382
        %v422 = vunpack.c.h.b16 %v382
        %v423 = vunpack.c.l.b16 %v383
        %v424 = vunpack.c.h.b16 %v383
        %v425 = vunpack.c.l.b16 %v384
        %v426 = vunpack.c.h.b16 %v384
        %v427 = vunpack.c.l.b16 %v385
        %v428 = vunpack.c.h.b16 %v385
        %v429 = vunpack.c.l.b16 %v386
        %v430 = vunpack.c.h.b16 %v386
        %v431 = vunpack.c.l.b16 %v387
        %v432 = vunpack.c.h.b16 %v387
        %v433 = vunpack.c.l.b16 %v388
        %v434 = vunpack.c.h.b16 %v388
        %v435 = vunpack.c.l.b16 %v389
        %v436 = vunpack.c.h.b16 %v389
        %v437 = vunpack.c.l.b16 %v390
        %v438 = vunpack.c.h.b16 %v390
        %v439 = vpack.c.b16 %v409, %v407
        %v440 = vpack.c.b16 %v410, %v408
        %v441 = vpack.c.b16 %v413, %v411
        %v442 = vpack.c.b16 %v414, %v412
        %v443 = vpack.c.b16 %v417, %v415
        %v444 = vpack.c.b16 %v418, %v416
        %v445 = vpack.c.b16 %v421, %v419
        %v446 = vpack.c.b16 %v422, %v420
        %v447 = vpack.c.b16 %v425, %v423
        %v448 = vpack.c.b16 %v426, %v424
        %v449 = vpack.c.b16 %v429, %v427
        %v450 = vpack.c.b16 %v430, %v428
        %v451 = vpack.c.b16 %v433, %v431
        %v452 = vpack.c.b16 %v434, %v432
        %v453 = vpack.c.b16 %v437, %v435
        %v454 = vpack.c.b16 %v438, %v436
        %v503 = vunpack.c.l.b16 %v327
        %v504 = vunpack.c.l.b16 %v328
        %v505 = vunpack.c.l.b16 %v329
        %v506 = vunpack.c.l.b16 %v330
        %v507 = vunpack.c.l.b16 %v331
        %v508 = vunpack.c.l.b16 %v332
        %v509 = vunpack.c.l.b16 %v333
        %v510 = vunpack.c.l.b16 %v334
        %v511 = vunpack.c.l.b16 %v335
        %v512 = vunpack.c.l.b16 %v336
        %v513 = vunpack.c.l.b16 %v337
        %v514 = vunpack.c.l.b16 %v338
        %v515 = vunpack.c.l.b16 %v339
        %v516 = vunpack.c.l.b16 %v340
        %v517 = vunpack.c.l.b16 %v341
        %v518 = vunpack.c.l.b16 %v342
        %v519 = vunpack.c.l.b16 %v343
        %v520 = vunpack.c.l.b16 %v344
        %v521 = vunpack.c.l.b16 %v345
        %v522 = vunpack.c.l.b16 %v346
        %v523 = vunpack.c.l.b16 %v347
        %v524 = vunpack.c.l.b16 %v348
        %v525 = vunpack.c.l.b16 %v349
        %v526 = vunpack.c.l.b16 %v350
        %v527 = vunpack.c.l.b16 %v351
        %v528 = vunpack.c.l.b16 %v352
        %v529 = vunpack.c.l.b16 %v353
        %v530 = vunpack.c.l.b16 %v354
        %v531 = vunpack.c.l.b16 %v355
        %v532 = vunpack.c.l.b16 %v356
        %v533 = vunpack.c.l.b16 %v357
        %v534 = vunpack.c.l.b16 %v358
        %v535 = vpack.c.b16 %v504, %v503
        %v536 = vpack.c.b16 %v506, %v505
        %v537 = vpack.c.b16 %v508, %v507
        %v538 = vpack.c.b16 %v510, %v509
        %v539 = vpack.c.b16 %v512, %v511
        %v540 = vpack.c.b16 %v514, %v513
        %v541 = vpack.c.b16 %v516, %v515
        %v542 = vpack.c.b16 %v518, %v517
        %v543 = vpack.c.b16 %v520, %v519
        %v544 = vpack.c.b16 %v522, %v521
        %v545 = vpack.c.b16 %v524, %v523
        %v546 = vpack.c.b16 %v526, %v525
        %v547 = vpack.c.b16 %v528, %v527
        %v548 = vpack.c.b16 %v530, %v529
        %v549 = vpack.c.b16 %v532, %v531
        %v550 = vpack.c.b16 %v534, %v533
        %567 = vmatprep.subr.bf16.mxu0 0
        %568 = vmatpush1.bf16.msra.mxu0 %v535
        %569 = vmatprep.subr.bf16.mxu0 0
        %570 = vmatpush1.bf16.msra.mxu0 %v536
        %571 = vmatprep.subr.bf16.mxu0 0
        %572 = vmatpush1.bf16.msra.mxu0 %v537
        %573 = vmatprep.subr.bf16.mxu0 0
        %574 = vmatpush1.bf16.msra.mxu0 %v538
        %575 = vmatprep.subr.bf16.mxu0 0
        %576 = vmatpush1.bf16.msra.mxu0 %v539
        %577 = vmatprep.subr.bf16.mxu0 0
        %578 = vmatpush1.bf16.msra.mxu0 %v540
        %579 = vmatprep.subr.bf16.mxu0 0
        %580 = vmatpush1.bf16.msra.mxu0 %v541
        %581 = vmatprep.subr.bf16.mxu0 0
        %582 = vmatpush1.bf16.msra.mxu0 %v542
        %583 = vmatprep.subr.bf16.mxu0 0
        %584 = vmatpush1.bf16.msra.mxu0 %v543
        %585 = vmatprep.subr.bf16.mxu0 0
        %586 = vmatpush1.bf16.msra.mxu0 %v544
        %587 = vmatprep.subr.bf16.mxu0 0
        %588 = vmatpush1.bf16.msra.mxu0 %v545
        %589 = vmatprep.subr.bf16.mxu0 0
        %590 = vmatpush1.bf16.msra.mxu0 %v546
        %591 = vmatprep.subr.bf16.mxu0 0
        %592 = vmatpush1.bf16.msra.mxu0 %v547
        %593 = vmatprep.subr.bf16.mxu0 0
        %594 = vmatpush1.bf16.msra.mxu0 %v548
        %595 = vmatprep.subr.bf16.mxu0 0
        %596 = vmatpush1.bf16.msra.mxu0 %v549
        %597 = vmatprep.subr.bf16.mxu0 0
        %598 = vmatpush1.bf16.msra.mxu0 %v550
        %599 = vmatprep.mubr.bf16.mxu0 %v440
        %600 = vmatmul.mubr.bf16.gmra.mrb[0].mxu0 %v439
        %v601 = vpop.f32.mrb[0].mxu0
        %v602 = vadd.f32 0.0, %v601
        %v603 = vpop.f32.mrb[0].mxu0
        %v604 = vpop.f32.mrb[0].mxu0
        %v605 = vadd.f32 0.0, %v604
        %v606 = vpop.f32.mrb[0].mxu0
        %607 = vmatprep.mubr.bf16.mxu0 %v442
        %608 = vmatmul.mubr.bf16.gmra.mrb[0].mxu0 %v441
        %v609 = vpop.f32.mrb[0].mxu0
        %v610 = vadd.f32 0.0, %v609
        %v611 = vpop.f32.mrb[0].mxu0
        %v612 = vpop.f32.mrb[0].mxu0
        %v613 = vadd.f32 0.0, %v612
        %v614 = vpop.f32.mrb[0].mxu0
        %615 = vmatprep.mubr.bf16.mxu0 %v444
        %616 = vmatmul.mubr.bf16.gmra.mrb[0].mxu0 %v443
        %v617 = vpop.f32.mrb[0].mxu0
        %v618 = vadd.f32 0.0, %v617
        %v619 = vpop.f32.mrb[0].mxu0
        %v620 = vpop.f32.mrb[0].mxu0
        %v621 = vadd.f32 0.0, %v620
        %v622 = vpop.f32.mrb[0].mxu0
        %623 = vmatprep.mubr.bf16.mxu0 %v446
        %624 = vmatmul.mubr.bf16.gmra.mrb[0].mxu0 %v445
        %v625 = vpop.f32.mrb[0].mxu0
        %v626 = vadd.f32 0.0, %v625
        %v627 = vpop.f32.mrb[0].mxu0
        %v628 = vpop.f32.mrb[0].mxu0
        %v629 = vadd.f32 0.0, %v628
        %v630 = vpop.f32.mrb[0].mxu0
        %631 = vmatprep.mubr.bf16.mxu0 %v448
        %632 = vmatmul.mubr.bf16.gmra.mrb[0].mxu0 %v447
        %v633 = vpop.f32.mrb[0].mxu0
        %v634 = vadd.f32 0.0, %v633
        %v635 = vpop.f32.mrb[0].mxu0
        %v636 = vpop.f32.mrb[0].mxu0
        %v637 = vadd.f32 0.0, %v636
        %v638 = vpop.f32.mrb[0].mxu0
        %639 = vmatprep.mubr.bf16.mxu0 %v450
        %640 = vmatmul.mubr.bf16.gmra.mrb[0].mxu0 %v449
        %v641 = vpop.f32.mrb[0].mxu0
        %v642 = vadd.f32 0.0, %v641
        %v643 = vpop.f32.mrb[0].mxu0
        %v644 = vpop.f32.mrb[0].mxu0
        %v645 = vadd.f32 0.0, %v644
        %v646 = vpop.f32.mrb[0].mxu0
        %647 = vmatprep.mubr.bf16.mxu0 %v452
        %648 = vmatmul.mubr.bf16.gmra.mrb[0].mxu0 %v451
        %v649 = vpop.f32.mrb[0].mxu0
        %v650 = vadd.f32 0.0, %v649
        %v651 = vpop.f32.mrb[0].mxu0
        %v652 = vpop.f32.mrb[0].mxu0
        %v653 = vadd.f32 0.0, %v652
        %v654 = vpop.f32.mrb[0].mxu0
        %655 = vmatprep.mubr.bf16.mxu0 %v454
        %656 = vmatmul.mubr.bf16.gmra.mrb[0].mxu0 %v453
        %v657 = vpop.f32.mrb[0].mxu0
        %v658 = vadd.f32 0.0, %v657
        %v659 = vpop.f32.mrb[0].mxu0
        %v660 = vpop.f32.mrb[0].mxu0
        %v661 = vadd.f32 0.0, %v660
        %v662 = vpop.f32.mrb[0].mxu0
        %663 = vdwg.mxu0
        %v664 = vadd.f32 %v359, %v602
        %v665 = vadd.f32 %v360, %v605
        %v666 = vadd.f32 %v361, %v610
        %v667 = vadd.f32 %v362, %v613
        %v668 = vadd.f32 %v363, %v618
        %v669 = vadd.f32 %v364, %v621
        %v670 = vadd.f32 %v365, %v626
        %v671 = vadd.f32 %v366, %v629
        %v672 = vadd.f32 %v367, %v634
        %v673 = vadd.f32 %v368, %v637
        %v674 = vadd.f32 %v369, %v642
        %v675 = vadd.f32 %v370, %v645
        %v676 = vadd.f32 %v371, %v650
        %v677 = vadd.f32 %v372, %v653
        %v678 = vadd.f32 %v373, %v658
        %v679 = vadd.f32 %v374, %v661
        %680 = vst [vmem:[%s295] sm:$0xff] %v664
        %681 = vst [vmem:[%s295 + $0x8] sm:$0xff] %v665
        %682 = vst [vmem:[%s295 + $0x10] sm:$0xff] %v666
        %683 = vst [vmem:[%s295 + $0x18] sm:$0xff] %v667
        %684 = vst [vmem:[%s295 + $0x20] sm:$0xff] %v668
        %685 = vst [vmem:[%s295 + $0x28] sm:$0xff] %v669
        %686 = vst [vmem:[%s295 + $0x30] sm:$0xff] %v670
        %687 = vst [vmem:[%s295 + $0x38] sm:$0xff] %v671
        %688 = vst [vmem:[%s295 + $0x40] sm:$0xff] %v672
        %689 = vst [vmem:[%s295 + $0x48] sm:$0xff] %v673
        %690 = vst [vmem:[%s295 + $0x50] sm:$0xff] %v674
        %691 = vst [vmem:[%s295 + $0x58] sm:$0xff] %v675
        %692 = vst [vmem:[%s295 + $0x60] sm:$0xff] %v676
        %693 = vst [vmem:[%s295 + $0x68] sm:$0xff] %v677
        %694 = vst [vmem:[%s295 + $0x70] sm:$0xff] %v678
        %695 = vst [vmem:[%s295 + $0x78] sm:$0xff] %v679
        // Predicated region
        $region49: #{tpu_custom_call.1} parent=31 // pred_check
          %p696 = pneg %p302
        $region50: #{tpu_custom_call.1} parent=31 // pred_check_branch
          %698 = sbr.rel (%p696) target = $region52
        $region51: #{tpu_custom_call.1} parent=31 // pred_region
          %v699 = vld [vmem:[%s295] sm:$0xff]
          %v700 = vld [vmem:[%s295 + $0x8] sm:$0xff]
          %v701 = vld [vmem:[%s295 + $0x10] sm:$0xff]
          %v702 = vld [vmem:[%s295 + $0x18] sm:$0xff]
          %v703 = vld [vmem:[%s295 + $0x20] sm:$0xff]
          %v704 = vld [vmem:[%s295 + $0x28] sm:$0xff]
          %v705 = vld [vmem:[%s295 + $0x30] sm:$0xff]
          %v706 = vld [vmem:[%s295 + $0x38] sm:$0xff]
          %v707 = vld [vmem:[%s295 + $0x40] sm:$0xff]
          %v708 = vld [vmem:[%s295 + $0x48] sm:$0xff]
          %v709 = vld [vmem:[%s295 + $0x50] sm:$0xff]
          %v710 = vld [vmem:[%s295 + $0x58] sm:$0xff]
          %v711 = vld [vmem:[%s295 + $0x60] sm:$0xff]
          %v712 = vld [vmem:[%s295 + $0x68] sm:$0xff]
          %v713 = vld [vmem:[%s295 + $0x70] sm:$0xff]
          %v714 = vld [vmem:[%s295 + $0x78] sm:$0xff]
          %v715 = vpack.c.bf16 %v700, %v699
          %v716 = vpack.c.bf16 %v702, %v701
          %v717 = vpack.c.bf16 %v704, %v703
          %v718 = vpack.c.bf16 %v706, %v705
          %v719 = vpack.c.bf16 %v708, %v707
          %v720 = vpack.c.bf16 %v710, %v709
          %v721 = vpack.c.bf16 %v712, %v711
          %v722 = vpack.c.bf16 %v714, %v713
          %v731 = vunpack.c.l.b16 %v715
          %v732 = vunpack.c.h.b16 %v715
          %v733 = vunpack.c.l.b16 %v716
          %v734 = vunpack.c.h.b16 %v716
          %v735 = vunpack.c.l.b16 %v717
          %v736 = vunpack.c.h.b16 %v717
          %v737 = vunpack.c.l.b16 %v718
          %v738 = vunpack.c.h.b16 %v718
          %v739 = vunpack.c.l.b16 %v719
          %v740 = vunpack.c.h.b16 %v719
          %v741 = vunpack.c.l.b16 %v720
          %v742 = vunpack.c.h.b16 %v720
          %v743 = vunpack.c.l.b16 %v721
          %v744 = vunpack.c.h.b16 %v721
          %v745 = vunpack.c.l.b16 %v722
          %v746 = vunpack.c.h.b16 %v722
          %v747 = vpack.c.b16 %v731, %v731
          %v748 = vpack.c.b16 %v732, %v732
          %v749 = vpack.c.b16 %v733, %v733
          %v750 = vpack.c.b16 %v734, %v734
          %v751 = vpack.c.b16 %v735, %v735
          %v752 = vpack.c.b16 %v736, %v736
          %v753 = vpack.c.b16 %v737, %v737
          %v754 = vpack.c.b16 %v738, %v738
          %v755 = vpack.c.b16 %v739, %v739
          %v756 = vpack.c.b16 %v740, %v740
          %v757 = vpack.c.b16 %v741, %v741
          %v758 = vpack.c.b16 %v742, %v742
          %v759 = vpack.c.b16 %v743, %v743
          %v760 = vpack.c.b16 %v744, %v744
          %v761 = vpack.c.b16 %v745, %v745
          %v762 = vpack.c.b16 %v746, %v746
          %779 = vst [vmem:[%s288] sm:$0xf] %v747
          %780 = vst [vmem:[%s288 + $0x4] sm:$0xf] %v748
          %781 = vst [vmem:[%s288 + $0x8] sm:$0xf] %v749
          %782 = vst [vmem:[%s288 + $0xc] sm:$0xf] %v750
          %783 = vst [vmem:[%s288 + $0x10] sm:$0xf] %v751
          %784 = vst [vmem:[%s288 + $0x14] sm:$0xf] %v752
          %785 = vst [vmem:[%s288 + $0x18] sm:$0xf] %v753
          %786 = vst [vmem:[%s288 + $0x1c] sm:$0xf] %v754
          %787 = vst [vmem:[%s288 + $0x20] sm:$0xf] %v755
          %788 = vst [vmem:[%s288 + $0x24] sm:$0xf] %v756
          %789 = vst [vmem:[%s288 + $0x28] sm:$0xf] %v757
          %790 = vst [vmem:[%s288 + $0x2c] sm:$0xf] %v758
          %791 = vst [vmem:[%s288 + $0x30] sm:$0xf] %v759
          %792 = vst [vmem:[%s288 + $0x34] sm:$0xf] %v760
          %793 = vst [vmem:[%s288 + $0x38] sm:$0xf] %v761
          %794 = vst [vmem:[%s288 + $0x3c] sm:$0xf] %v762
          %v795 = vld [vmem:[%s295] sm:$0xff]
          %v796 = vld [vmem:[%s295 + $0x8] sm:$0xff]
          %v797 = vld [vmem:[%s295 + $0x10] sm:$0xff]
          %v798 = vld [vmem:[%s295 + $0x18] sm:$0xff]
          %v799 = vld [vmem:[%s295 + $0x20] sm:$0xff]
          %v800 = vld [vmem:[%s295 + $0x28] sm:$0xff]
          %v801 = vld [vmem:[%s295 + $0x30] sm:$0xff]
          %v802 = vld [vmem:[%s295 + $0x38] sm:$0xff]
          %v803 = vld [vmem:[%s295 + $0x40] sm:$0xff]
          %v804 = vld [vmem:[%s295 + $0x48] sm:$0xff]
          %v805 = vld [vmem:[%s295 + $0x50] sm:$0xff]
          %v806 = vld [vmem:[%s295 + $0x58] sm:$0xff]
          %v807 = vld [vmem:[%s295 + $0x60] sm:$0xff]
          %v808 = vld [vmem:[%s295 + $0x68] sm:$0xff]
          %v809 = vld [vmem:[%s295 + $0x70] sm:$0xff]
          %v810 = vld [vmem:[%s295 + $0x78] sm:$0xff]
          %v811 = vld [vmem:[%s261] sm:$0xff]
          %v812 = vld [vmem:[%s261 + $0x8] sm:$0xff]
          %v813 = vld [vmem:[%s261 + $0x10] sm:$0xff]
          %v814 = vld [vmem:[%s261 + $0x18] sm:$0xff]
          %v815 = vld [vmem:[%s261 + $0x20] sm:$0xff]
          %v816 = vld [vmem:[%s261 + $0x28] sm:$0xff]
          %v817 = vld [vmem:[%s261 + $0x30] sm:$0xff]
          %v818 = vld [vmem:[%s261 + $0x38] sm:$0xff]
          %v819 = vld [vmem:[%s261 + $0x40] sm:$0xff]
          %v820 = vld [vmem:[%s261 + $0x48] sm:$0xff]
          %v821 = vld [vmem:[%s261 + $0x50] sm:$0xff]
          %v822 = vld [vmem:[%s261 + $0x58] sm:$0xff]
          %v823 = vld [vmem:[%s261 + $0x60] sm:$0xff]
          %v824 = vld [vmem:[%s261 + $0x68] sm:$0xff]
          %v825 = vld [vmem:[%s261 + $0x70] sm:$0xff]
          %v826 = vld [vmem:[%s261 + $0x78] sm:$0xff]
          %v827 = vadd.f32 %v795, %v811
          %v828 = vadd.f32 %v796, %v812
          %v829 = vadd.f32 %v797, %v813
          %v830 = vadd.f32 %v798, %v814
          %v831 = vadd.f32 %v799, %v815
          %v832 = vadd.f32 %v800, %v816
          %v833 = vadd.f32 %v801, %v817
          %v834 = vadd.f32 %v802, %v818
          %v835 = vadd.f32 %v803, %v819
          %v836 = vadd.f32 %v804, %v820
          %v837 = vadd.f32 %v805, %v821
          %v838 = vadd.f32 %v806, %v822
          %v839 = vadd.f32 %v807, %v823
          %v840 = vadd.f32 %v808, %v824
          %v841 = vadd.f32 %v809, %v825
          %v842 = vadd.f32 %v810, %v826
          %843 = vst [vmem:[%s295] sm:$0xff] %v827
          %844 = vst [vmem:[%s295 + $0x8] sm:$0xff] %v828
          %845 = vst [vmem:[%s295 + $0x10] sm:$0xff] %v829
          %846 = vst [vmem:[%s295 + $0x18] sm:$0xff] %v830
          %847 = vst [vmem:[%s295 + $0x20] sm:$0xff] %v831
          %848 = vst [vmem:[%s295 + $0x28] sm:$0xff] %v832
          %849 = vst [vmem:[%s295 + $0x30] sm:$0xff] %v833
          %850 = vst [vmem:[%s295 + $0x38] sm:$0xff] %v834
          %851 = vst [vmem:[%s295 + $0x40] sm:$0xff] %v835
          %852 = vst [vmem:[%s295 + $0x48] sm:$0xff] %v836
          %853 = vst [vmem:[%s295 + $0x50] sm:$0xff] %v837
          %854 = vst [vmem:[%s295 + $0x58] sm:$0xff] %v838
          %855 = vst [vmem:[%s295 + $0x60] sm:$0xff] %v839
          %856 = vst [vmem:[%s295 + $0x68] sm:$0xff] %v840
          %857 = vst [vmem:[%s295 + $0x70] sm:$0xff] %v841
          %858 = vst [vmem:[%s295 + $0x78] sm:$0xff] %v842
        $region52: #{tpu_custom_call.1} parent=31 // pred_fallthru
          _
        %s859 = sand.u32 %s121, 1
        %s860 = scalar_lea.sflag [#allocation4], %s859
        %s861 = sand.u32 %s121, 1
        %s862 = smul.addr %s861, 64
        %s863 = scalar_lea.vmem [#allocation8], %s862
        %s864 = sand.u32 %s147, 1
        %s865 = scalar_lea.sflag [#allocation10], %s864
        %s866 = sand.u32 %s147, 1
        %s867 = smul.addr %s866, 128
        %s868 = scalar_lea.vmem [#allocation9], %s867
        // Predicated region
        $region53: #{tpu_custom_call.1} parent=31 // pred_check
          %p869 = pneg %p131
        $region54: #{tpu_custom_call.1} parent=31 // pred_check_branch
          %871 = sbr.rel (%p869) target = $region56
        $region55: #{tpu_custom_call.1} parent=31 // pred_region
          %s872 = smul.u32 16, %s30
          %s874 = ssub.s32 1024, 1024
          %875 = vsyncadd %s860, %s874
          %s876 = smul.addr %s872, 64
          %s877 = scalar_lea.hbm %s3, %s876
          %s878 = sshll.u32 %s863, 4
          %s879 = int_to_ptr.vmem [resolvable:$true] %s878
          %884 = dma.vmem_to_hbm [thread:$0]  %s879, 1024, %s877, %s860, 64, 64, 4
        $region56: #{tpu_custom_call.1} parent=31 // pred_fallthru
          _
        // Predicated region
        $region57: #{tpu_custom_call.1} parent=31 // pred_check
          %p885 = pneg %p157
        $region58: #{tpu_custom_call.1} parent=31 // pred_check_branch
          %887 = sbr.rel (%p885) target = $region60
        $region59: #{tpu_custom_call.1} parent=31 // pred_region
          %s888 = smul.u32 16, %s30
          %s890 = ssub.s32 2048, 2048
          %891 = vsyncadd %s865, %s890
          %s892 = smul.addr %s888, 128
          %s893 = scalar_lea.hbm %s4, %s892
          %s894 = sshll.u32 %s868, 4
          %s895 = int_to_ptr.vmem [resolvable:$true] %s894
          %900 = dma.vmem_to_hbm [thread:$0]  %s895, 2048, %s893, %s865, 128, 128, 8
        $region60: #{tpu_custom_call.1} parent=31 // pred_fallthru
          _
      $region32: #{tpu_custom_call.1} parent=5 // pred_fallthru
        _
      %p901 = scmp.le.s32.totalorder 2, %s21
      // Predicated region
      $region61: #{tpu_custom_call.1} parent=5 // pred_check
        %p902 = pneg %p901
      $region62: #{tpu_custom_call.1} parent=5 // pred_check_branch
        %904 = sbr.rel (%p902) target = $region64
      $region63: #{tpu_custom_call.1} parent=5 // pred_region
        %s905 = ssub.s32 %s21, 2
        // Predicated region
        $region65: #{tpu_custom_call.1} parent=63 // pred_check
          %p906 = pneg %p137
        $region66: #{tpu_custom_call.1} parent=63 // pred_check_branch
          %908 = sbr.rel (%p906) target = $region68
        $region67: #{tpu_custom_call.1} parent=63 // pred_region
          %s909 = sand.u32 %s122, 1
          %s910 = scalar_lea.sflag [#allocation4], %s909
          %s911 = sand.u32 %s122, 1
          %s912 = smul.addr %s911, 64
          %s913 = scalar_lea.vmem [#allocation8], %s912
          %914 = dma.done %s910, 1024
        $region68: #{tpu_custom_call.1} parent=63 // pred_fallthru
          _
        // Predicated region
        $region69: #{tpu_custom_call.1} parent=63 // pred_check
          %p915 = pneg %p163
        $region70: #{tpu_custom_call.1} parent=63 // pred_check_branch
          %917 = sbr.rel (%p915) target = $region72
        $region71: #{tpu_custom_call.1} parent=63 // pred_region
          %s918 = sand.u32 %s148, 1
          %s919 = scalar_lea.sflag [#allocation10], %s918
          %s920 = sand.u32 %s148, 1
          %s921 = smul.addr %s920, 128
          %s922 = scalar_lea.vmem [#allocation9], %s921
          %923 = dma.done %s919, 2048
        $region72: #{tpu_custom_call.1} parent=63 // pred_fallthru
          _
      $region64: #{tpu_custom_call.1} parent=5 // pred_fallthru
        _
    $region6: #{tpu_custom_call.1} parent=1 // loop_footer
      %s25 = sadd.s32 1, %s21
    $region7: #{tpu_custom_call.1} parent=1 // loop_footer_branch
      %20 = sbr.rel target = $region3
    $region8: #{tpu_custom_call.1} parent=1 // loop_exit
      _
    %924 = vsyncpa [#allocation3], 1
    %s925 = scalar_lea.sflag [#allocation3], 1
    %926 = vsyncpa %s925, 1
    %927 = vsyncpa [#allocation6], 1
    %928 = vsyncpa [#allocation4], 1
    %s929 = scalar_lea.sflag [#allocation4], 1
    %930 = vsyncpa %s929, 1
    %931 = vsyncpa [#allocation10], 1
    %s932 = scalar_lea.sflag [#allocation10], 1
    %933 = vsyncpa %s932, 1

</llo_original>
